<compile_context>
chip_gen: v5e
topology: v5e:2x2
jax: 0.10.0
libtpu: 0.0.40
codegen_flags: <defaults>
</compile_context>

<pallas_src>
import functools

import numpy as np
import jax
import jax.numpy as jnp
from jax.experimental import pallas as pl
from jax.experimental.pallas import tpu as pltpu


def _round_up(x, m):
    return ((x + m - 1) // m) * m


def _mip_offsets(res, level):
    offs = [0]
    for i in range(level):
        offs.append(offs[-1] + (res // (2 ** i)) ** 2)
    return offs


def _slab_storage(n_rows, C):
    """Slab storage dtype + sub-block row count.

    f32 (no in-kernel casts; matters on v5e) whenever the lane-padded,
    double-buffered slab fits a conservative VMEM budget; bf16 otherwise.
    """
    lane_c = _round_up(max(C, 1), 128)
    if n_rows * lane_c * 4 * 2 <= 16 * 1024 * 1024:
        return jnp.float32, 8
    return jnp.bfloat16, 16


def _cubemap_face_uv(d):
    """d: (B,3) direction -> face id (B,1) int32, u, v in [0,1]."""
    # TODO(synk): convention matches the in-file reference; the original CUDA
    # fetch_mip_cube source is unavailable for a bit-exact convention check.
    dx, dy, dz = d[:, 0:1], d[:, 1:2], d[:, 2:3]
    ax, ay, az = jnp.abs(dx), jnp.abs(dy), jnp.abs(dz)
    is_x = (ax >= ay) & (ax >= az)
    is_y = jnp.logical_not(is_x) & (ay >= az)
    ma = jnp.maximum(jnp.where(is_x, ax, jnp.where(is_y, ay, az)), 1e-8)
    face = jnp.where(
        is_x, jnp.where(dx >= 0, 0, 1),
        jnp.where(is_y, jnp.where(dy >= 0, 2, 3),
                  jnp.where(dz >= 0, 4, 5))).astype(jnp.int32)
    u = jnp.where(is_x, jnp.where(dx >= 0, -dz, dz),
                  jnp.where(is_y, dx, jnp.where(dz >= 0, dx, -dx))) / ma
    v = jnp.where(is_x, -dy,
                  jnp.where(is_y, jnp.where(dy >= 0, dz, -dz), -dy)) / ma
    return face, u * 0.5 + 0.5, v * 0.5 + 0.5


def create_mip(feature, res, level):
    """Flattened mip pool (C, 6, total) from feature (C, 6, res, res)."""
    C = feature.shape[0]
    mips = [feature.reshape(C, 6, res * res)]
    f = feature
    for _ in range(1, level):
        h = f.shape[-1]
        f = f.reshape(C, 6, h // 2, 2, h // 2, 2).mean(axis=(3, 5))  # avg_pool2d(2,2)
        # TODO(synk): specular_filtering(feature, bound_i, roughness_i) omitted (external CUDA op).
        mips.append(f.reshape(C, 6, -1))
    return jnp.concatenate(mips, axis=-1)


def _compute_taps(w, r, *, res, level, total):
    """Per-query gather plan: 8 (flat slab-row index, weight) taps =
    2 bracketing mip levels x 4 bilinear corners.  Plain JAX, O(B)."""
    d = w.astype(jnp.float32) * 2.0 - 1.0
    face, u, v = _cubemap_face_uv(d)                        # (B,1) each
    rough = np.linspace(0.03, 0.99, level)
    rc = jnp.clip(r.astype(jnp.float32), float(rough[0]), float(rough[-1]))
    lvl_f = jnp.zeros_like(rc)
    for l in range(level - 1):
        lvl_f = lvl_f + jnp.clip(
            (rc - float(rough[l])) / float(rough[l + 1] - rough[l]), 0.0, 1.0)
    l0 = jnp.clip(jnp.floor(lvl_f).astype(jnp.int32), 0, level - 1)
    l1 = jnp.minimum(l0 + 1, level - 1)
    fl = lvl_f - l0.astype(jnp.float32)                     # frac between the 2 levels

    offs = _mip_offsets(res, level)
    res_tab = jnp.asarray([res // (2 ** l) for l in range(level)], dtype=jnp.int32)
    off_tab = jnp.asarray(offs[:level], dtype=jnp.int32)

    idx_parts, wt_parts = [], []
    for lvl, lvl_w in ((l0, 1.0 - fl), (l1, fl)):
        res_l = res_tab[lvl]                                # (B,1) int32
        off_l = off_tab[lvl]                                # (B,1) int32
        res_f = res_l.astype(jnp.float32)
        x = u * res_f - 0.5
        y = v * res_f - 0.5
        x0f = jnp.floor(x)
        y0f = jnp.floor(y)
        fx = x - x0f
        fy = y - y0f
        x0 = jnp.clip(x0f.astype(jnp.int32), 0, res_l - 1)
        x1 = jnp.clip(x0f.astype(jnp.int32) + 1, 0, res_l - 1)
        y0 = jnp.clip(y0f.astype(jnp.int32), 0, res_l - 1)
        y1 = jnp.clip(y0f.astype(jnp.int32) + 1, 0, res_l - 1)
        base = face * total + off_l
        for xi, yi, bw in ((x0, y0, (1.0 - fx) * (1.0 - fy)),
                           (x1, y0, fx * (1.0 - fy)),
                           (x0, y1, (1.0 - fx) * fy),
                           (x1, y1, fx * fy)):
            idx_parts.append(base + yi * res_l + xi)
            wt_parts.append(lvl_w * bw)
    return (jnp.concatenate(idx_parts, axis=1),             # (B, 8) int32
            jnp.concatenate(wt_parts, axis=1))               # (B, 8) f32


def _gather_kernel(blkidx_ref, sel_ref, slab_ref, out_ref):
    """Gather + weighted reduction for one tile of queries.

    blkidx_ref: (Bp*taps,) int32 in SMEM (scalar prefetch): slab sub-block per tap.
    sel_ref:    (bt, sub, taps) f32 in VMEM: per-query weighted one-hot row
                selector (tap weight folded in; precomputed on host, so the
                kernel does no div/mod, no iota compares, no scalar broadcasts).
    slab_ref:   (n_sub, sub, C) in VMEM: row-padded, sub-blocked mip pool;
                constant block index -> resident across the whole grid.
    out_ref:    (bt, 1, C) f32: queried features for this query tile.
    """
    bt, sub, taps = sel_ref.shape
    C = slab_ref.shape[-1]
    row0 = pl.program_id(0) * bt           # hoisted, loop-invariant

    def body(q, carry):
        sel_q = sel_ref[q]                                   # (sub, taps) f32
        base = (row0 + q) * taps
        acc = jnp.zeros((sub, C), jnp.float32)
        for t in range(taps):                                # static unroll: 8 taps
            blk = slab_ref[blkidx_ref[base + t]]             # (sub, C) dyn. leading-axis load
            acc = acc + sel_q[:, t:t + 1] * blk.astype(jnp.float32)
        # single cross-sublane reduction per query (was one per tap), then a
        # direct dynamic row store (no jnp.concatenate of row fragments).
        out_ref[q] = jnp.sum(acc, axis=0, keepdims=True)     # (1, C)
        return carry

    jax.lax.fori_loop(0, bt, body, 0)


@functools.partial(jax.jit, static_argnames=("res", "level", "block_b"))
def cubemap_encoding_forward(feature, w, r, *, res, level, block_b=128):
    C = feature.shape[0]
    mip = create_mip(feature, res, level)                    # (C, 6, total) f32
    total = mip.shape[-1]
    n_rows = 6 * total
    slab_dtype, sub = _slab_storage(n_rows, C)

    # Gather-friendly layout: rows = (face, texel) flattened, channels last,
    # padded to a multiple of `sub` and sub-blocked so the in-kernel dynamic
    # gather index lands on the *untiled* leading axis.
    slab = jnp.transpose(mip, (1, 2, 0)).reshape(n_rows, C)
    pad_rows = (-n_rows) % sub
    if pad_rows:
        slab = jnp.pad(slab, ((0, pad_rows), (0, 0)))
    slab = slab.astype(slab_dtype).reshape(-1, sub, C)       # (n_sub, sub, C)
    n_sub = slab.shape[0]

    # Query tile: large enough to amortize the ~0.35us per-grid-step overhead.
    B = w.shape[0]
    bt = max(8, min(block_b, _round_up(B, 8)))
    Bp = _round_up(B, bt)
    if Bp != B:
        w = jnp.pad(w, ((0, Bp - B), (0, 0)))
        r = jnp.pad(r, ((0, Bp - B),))

    # O(B) host-side gather plan.  Only the int32 sub-block indices go to SMEM;
    # the weights live in VMEM (folded into a per-query one-hot row selector).
    idx, wt = _compute_taps(w, r.reshape(Bp, 1), res=res, level=level, total=total)
    taps = idx.shape[1]                                      # == 8
    blk_idx = (idx // sub).astype(jnp.int32).reshape(-1)     # (Bp*taps,)
    sub_row = (idx % sub).astype(jnp.int32)                  # (Bp, taps)
    one_hot = (sub_row[:, None, :] ==
               jnp.arange(sub, dtype=jnp.int32)[None, :, None]).astype(jnp.float32)
    sel = (wt.astype(jnp.float32)[:, None, :] * one_hot)     # (Bp, sub, taps)

    grid_spec = pltpu.PrefetchScalarGridSpec(
        num_scalar_prefetch=1,                               # blk_idx -> SMEM
        grid=(Bp // bt,),
        in_specs=[
            pl.BlockSpec((bt, sub, taps), lambda i, *_: (i, 0, 0)),   # sel (VMEM)
            # Constant block index -> the slab is DMA'd once and stays resident.
            pl.BlockSpec((n_sub, sub, C), lambda i, *_: (0, 0, 0)),   # slab (VMEM)
        ],
        out_specs=pl.BlockSpec((bt, 1, C), lambda i, *_: (i, 0, 0)),
    )
    out = pl.pallas_call(
        _gather_kernel,
        out_shape=jax.ShapeDtypeStruct((Bp, 1, C), jnp.float32),
        grid_spec=grid_spec,
        compiler_params=pltpu.CompilerParams(
            dimension_semantics=("parallel",),               # megacore sharding
            vmem_limit_bytes=64 * 1024 * 1024),
    )(blk_idx, sel, slab)
    return out.reshape(Bp, C)[:B]


def reference_forward(feature, w, r, *, res, level):
    """Pure-JAX reference (tent blend over all mip levels) using the same slab
    storage dtype as the kernel, so the comparison isolates kernel logic."""
    C = feature.shape[0]
    mip = create_mip(feature, res, level)
    total = mip.shape[-1]
    n_rows = 6 * total
    slab_dtype, _ = _slab_storage(n_rows, C)
    slab = (jnp.transpose(mip, (1, 2, 0)).reshape(n_rows, C)
            .astype(slab_dtype).astype(jnp.float32))
    d = w * 2.0 - 1.0
    face, u, v = _cubemap_face_uv(d)
    rough = np.linspace(0.03, 0.99, level)
    rc = jnp.clip(r.reshape(-1, 1), float(rough[0]), float(rough[-1]))
    lvl_f = jnp.zeros_like(rc)
    for l in range(level - 1):
        lvl_f = lvl_f + jnp.clip(
            (rc - float(rough[l])) / float(rough[l + 1] - rough[l]), 0.0, 1.0)
    offs = _mip_offsets(res, level)
    out = jnp.zeros((w.shape[0], C), jnp.float32)
    for l in range(level):
        res_l = res // (2 ** l)
        lw = jnp.clip(1.0 - jnp.abs(lvl_f - float(l)), 0.0, 1.0)
        x = u * res_l - 0.5
        y = v * res_l - 0.5
        x0f = jnp.floor(x)
        y0f = jnp.floor(y)
        fx = x - x0f
        fy = y - y0f
        x0 = jnp.clip(x0f.astype(jnp.int32), 0, res_l - 1)
        x1 = jnp.clip(x0f.astype(jnp.int32) + 1, 0, res_l - 1)
        y0 = jnp.clip(y0f.astype(jnp.int32), 0, res_l - 1)
        y1 = jnp.clip(y0f.astype(jnp.int32) + 1, 0, res_l - 1)
        base = face * total + offs[l]
        for xi, yi, bw in ((x0, y0, (1.0 - fx) * (1.0 - fy)),
                           (x1, y0, fx * (1.0 - fy)),
                           (x0, y1, (1.0 - fx) * fy),
                           (x1, y1, fx * fy)):
            idx = (base + yi * res_l + xi)[:, 0]
            out = out + (lw * bw) * slab[idx]
    return out


if __name__ == "__main__":
    # Small CubemapEncoding(feature_size=8, res=16, level=3).  B=200 gives a
    # 2-step grid (balanced across v7x TensorCores) and exercises the padded
    # query path (200 is not a multiple of the 128-query tile).
    feature_size, res, level = 8, 16, 3
    B = 200
    key = jax.random.PRNGKey(0)
    kf, kw, kr = jax.random.split(key, 3)
    # deterministic "randn * 0.1" parameter init (synthetic, no checkpoint load)
    feature = jax.random.normal(kf, (feature_size, 6, res, res), jnp.float32) * 0.1
    w = jax.random.uniform(kw, (B, 3), jnp.float32)     # encoded direction in [0,1]
    r = jax.random.uniform(kr, (B,), jnp.float32)       # roughness in [0,1]

    out = cubemap_encoding_forward(feature, w, r, res=res, level=level)
    out = jax.block_until_ready(out)
    assert out.shape == (B, feature_size)

    ref = reference_forward(feature, w, r, res=res, level=level)
    assert np.allclose(np.asarray(out), np.asarray(ref), atol=1e-3, rtol=1e-3), \
        "Pallas kernel does not match pure-JAX reference"
    print("KERNEL_OK")
</pallas_src>

<mosaic_0001>
module attributes {stable_mosaic.version = 11 : i64} {
  func.func @_gather_kernel(%arg0: i32, %arg1: memref<2048xi32, #tpu.memory_space<smem>>, %arg2: memref<128x8x8xf32, #tpu.memory_space<vmem>>, %arg3: memref<252x8x8xf32, #tpu.memory_space<vmem>>, %arg4: memref<128x1x8xf32, #tpu.memory_space<vmem>>) attributes {dimension_semantics = [#tpu.dimension_semantics<parallel>], iteration_bounds = array<i64: 2>, scalar_prefetch = 1 : i64, scratch_operands = 0 : i64, tpu.core_type = #tpu.core_type<tc>, window_params = [{transform_indices = @transform_0, window_bounds = array<i64: 128, 8, 8>}, {pipeline_mode = #tpu.pipeline_mode<synchronous>, transform_indices = @transform_1, window_bounds = array<i64: 252, 8, 8>}, {transform_indices = @transform_2, window_bounds = array<i64: 128, 1, 8>}]} {
    %c128_i32 = arith.constant 128 : i32
    %0 = arith.muli %arg0, %c128_i32 : i32
    %c0_i32 = arith.constant 0 : i32
    %c128_i32_0 = arith.constant 128 : i32
    %1 = arith.addi %c0_i32, %c128_i32_0 : i32
    %c1_i32 = arith.constant 1 : i32
    scf.for %arg5 = %c0_i32 to %1 step %c1_i32  : i32 {
      %2 = arith.index_cast %arg5 : i32 to index
      %c0 = arith.constant 0 : index
      %c0_2 = arith.constant 0 : index
      %3 = vector.load %arg2[%2, %c0, %c0_2] : memref<128x8x8xf32, #tpu.memory_space<vmem>>, vector<1x8x8xf32>
      %4 = vector.shape_cast %3 : vector<1x8x8xf32> to vector<8x8xf32>
      %5 = arith.addi %0, %arg5 : i32
      %c8_i32 = arith.constant 8 : i32
      %6 = arith.muli %5, %c8_i32 : i32
      %cst = arith.constant 0.000000e+00 : f32
      %7 = vector.broadcast %cst : f32 to vector<8x8xf32>
      %c0_i32_3 = arith.constant 0 : i32
      %8 = arith.addi %6, %c0_i32_3 : i32
      %9 = arith.index_cast %8 : i32 to index
      %10 = memref.load %arg1[%9] : memref<2048xi32, #tpu.memory_space<smem>>
      %11 = arith.index_cast %10 : i32 to index
      %c0_4 = arith.constant 0 : index
      %c0_5 = arith.constant 0 : index
      %12 = vector.load %arg3[%11, %c0_4, %c0_5] : memref<252x8x8xf32, #tpu.memory_space<vmem>>, vector<1x8x8xf32>
      %13 = vector.shape_cast %12 : vector<1x8x8xf32> to vector<8x8xf32>
      %14 = vector.extract_strided_slice %4 {offsets = [0, 0], sizes = [8, 1], strides = [1, 1]} : vector<8x8xf32> to vector<8x1xf32>
      %15 = vector.broadcast %14 : vector<8x1xf32> to vector<8x8xf32>
      %16 = arith.mulf %15, %13 : vector<8x8xf32>
      %17 = arith.addf %7, %16 : vector<8x8xf32>
      %c1_i32_6 = arith.constant 1 : i32
      %18 = arith.addi %6, %c1_i32_6 : i32
      %19 = arith.index_cast %18 : i32 to index
      %20 = memref.load %arg1[%19] : memref<2048xi32, #tpu.memory_space<smem>>
      %21 = arith.index_cast %20 : i32 to index
      %c0_7 = arith.constant 0 : index
      %c0_8 = arith.constant 0 : index
      %22 = vector.load %arg3[%21, %c0_7, %c0_8] : memref<252x8x8xf32, #tpu.memory_space<vmem>>, vector<1x8x8xf32>
      %23 = vector.shape_cast %22 : vector<1x8x8xf32> to vector<8x8xf32>
      %24 = vector.extract_strided_slice %4 {offsets = [0, 1], sizes = [8, 1], strides = [1, 1]} : vector<8x8xf32> to vector<8x1xf32>
      %25 = vector.broadcast %24 : vector<8x1xf32> to vector<8x8xf32>
      %26 = arith.mulf %25, %23 : vector<8x8xf32>
      %27 = arith.addf %17, %26 : vector<8x8xf32>
      %c2_i32 = arith.constant 2 : i32
      %28 = arith.addi %6, %c2_i32 : i32
      %29 = arith.index_cast %28 : i32 to index
      %30 = memref.load %arg1[%29] : memref<2048xi32, #tpu.memory_space<smem>>
      %31 = arith.index_cast %30 : i32 to index
      %c0_9 = arith.constant 0 : index
      %c0_10 = arith.constant 0 : index
      %32 = vector.load %arg3[%31, %c0_9, %c0_10] : memref<252x8x8xf32, #tpu.memory_space<vmem>>, vector<1x8x8xf32>
      %33 = vector.shape_cast %32 : vector<1x8x8xf32> to vector<8x8xf32>
      %34 = vector.extract_strided_slice %4 {offsets = [0, 2], sizes = [8, 1], strides = [1, 1]} : vector<8x8xf32> to vector<8x1xf32>
      %35 = vector.broadcast %34 : vector<8x1xf32> to vector<8x8xf32>
      %36 = arith.mulf %35, %33 : vector<8x8xf32>
      %37 = arith.addf %27, %36 : vector<8x8xf32>
      %c3_i32 = arith.constant 3 : i32
      %38 = arith.addi %6, %c3_i32 : i32
      %39 = arith.index_cast %38 : i32 to index
      %40 = memref.load %arg1[%39] : memref<2048xi32, #tpu.memory_space<smem>>
      %41 = arith.index_cast %40 : i32 to index
      %c0_11 = arith.constant 0 : index
      %c0_12 = arith.constant 0 : index
      %42 = vector.load %arg3[%41, %c0_11, %c0_12] : memref<252x8x8xf32, #tpu.memory_space<vmem>>, vector<1x8x8xf32>
      %43 = vector.shape_cast %42 : vector<1x8x8xf32> to vector<8x8xf32>
      %44 = vector.extract_strided_slice %4 {offsets = [0, 3], sizes = [8, 1], strides = [1, 1]} : vector<8x8xf32> to vector<8x1xf32>
      %45 = vector.broadcast %44 : vector<8x1xf32> to vector<8x8xf32>
      %46 = arith.mulf %45, %43 : vector<8x8xf32>
      %47 = arith.addf %37, %46 : vector<8x8xf32>
      %c4_i32 = arith.constant 4 : i32
      %48 = arith.addi %6, %c4_i32 : i32
      %49 = arith.index_cast %48 : i32 to index
      %50 = memref.load %arg1[%49] : memref<2048xi32, #tpu.memory_space<smem>>
      %51 = arith.index_cast %50 : i32 to index
      %c0_13 = arith.constant 0 : index
      %c0_14 = arith.constant 0 : index
      %52 = vector.load %arg3[%51, %c0_13, %c0_14] : memref<252x8x8xf32, #tpu.memory_space<vmem>>, vector<1x8x8xf32>
      %53 = vector.shape_cast %52 : vector<1x8x8xf32> to vector<8x8xf32>
      %54 = vector.extract_strided_slice %4 {offsets = [0, 4], sizes = [8, 1], strides = [1, 1]} : vector<8x8xf32> to vector<8x1xf32>
      %55 = vector.broadcast %54 : vector<8x1xf32> to vector<8x8xf32>
      %56 = arith.mulf %55, %53 : vector<8x8xf32>
      %57 = arith.addf %47, %56 : vector<8x8xf32>
      %c5_i32 = arith.constant 5 : i32
      %58 = arith.addi %6, %c5_i32 : i32
      %59 = arith.index_cast %58 : i32 to index
      %60 = memref.load %arg1[%59] : memref<2048xi32, #tpu.memory_space<smem>>
      %61 = arith.index_cast %60 : i32 to index
      %c0_15 = arith.constant 0 : index
      %c0_16 = arith.constant 0 : index
      %62 = vector.load %arg3[%61, %c0_15, %c0_16] : memref<252x8x8xf32, #tpu.memory_space<vmem>>, vector<1x8x8xf32>
      %63 = vector.shape_cast %62 : vector<1x8x8xf32> to vector<8x8xf32>
      %64 = vector.extract_strided_slice %4 {offsets = [0, 5], sizes = [8, 1], strides = [1, 1]} : vector<8x8xf32> to vector<8x1xf32>
      %65 = vector.broadcast %64 : vector<8x1xf32> to vector<8x8xf32>
      %66 = arith.mulf %65, %63 : vector<8x8xf32>
      %67 = arith.addf %57, %66 : vector<8x8xf32>
      %c6_i32 = arith.constant 6 : i32
      %68 = arith.addi %6, %c6_i32 : i32
      %69 = arith.index_cast %68 : i32 to index
      %70 = memref.load %arg1[%69] : memref<2048xi32, #tpu.memory_space<smem>>
      %71 = arith.index_cast %70 : i32 to index
      %c0_17 = arith.constant 0 : index
      %c0_18 = arith.constant 0 : index
      %72 = vector.load %arg3[%71, %c0_17, %c0_18] : memref<252x8x8xf32, #tpu.memory_space<vmem>>, vector<1x8x8xf32>
      %73 = vector.shape_cast %72 : vector<1x8x8xf32> to vector<8x8xf32>
      %74 = vector.extract_strided_slice %4 {offsets = [0, 6], sizes = [8, 1], strides = [1, 1]} : vector<8x8xf32> to vector<8x1xf32>
      %75 = vector.broadcast %74 : vector<8x1xf32> to vector<8x8xf32>
      %76 = arith.mulf %75, %73 : vector<8x8xf32>
      %77 = arith.addf %67, %76 : vector<8x8xf32>
      %c7_i32 = arith.constant 7 : i32
      %78 = arith.addi %6, %c7_i32 : i32
      %79 = arith.index_cast %78 : i32 to index
      %80 = memref.load %arg1[%79] : memref<2048xi32, #tpu.memory_space<smem>>
      %81 = arith.index_cast %80 : i32 to index
      %c0_19 = arith.constant 0 : index
      %c0_20 = arith.constant 0 : index
      %82 = vector.load %arg3[%81, %c0_19, %c0_20] : memref<252x8x8xf32, #tpu.memory_space<vmem>>, vector<1x8x8xf32>
      %83 = vector.shape_cast %82 : vector<1x8x8xf32> to vector<8x8xf32>
      %84 = vector.extract_strided_slice %4 {offsets = [0, 7], sizes = [8, 1], strides = [1, 1]} : vector<8x8xf32> to vector<8x1xf32>
      %85 = vector.broadcast %84 : vector<8x1xf32> to vector<8x8xf32>
      %86 = arith.mulf %85, %83 : vector<8x8xf32>
      %87 = arith.addf %77, %86 : vector<8x8xf32>
      %cst_21 = arith.constant dense<0.000000e+00> : vector<8xf32>
      %88 = vector.multi_reduction <add>, %87, %cst_21 [0] : vector<8x8xf32> to vector<8xf32>
      %89 = vector.shape_cast %88 : vector<8xf32> to vector<1x8xf32>
      %90 = arith.index_cast %arg5 : i32 to index
      %c0_22 = arith.constant 0 : index
      %c0_23 = arith.constant 0 : index
      %91 = vector.load %arg4[%90, %c0_22, %c0_23] : memref<128x1x8xf32, #tpu.memory_space<vmem>>, vector<1x1x8xf32>
      %92 = vector.shape_cast %91 : vector<1x1x8xf32> to vector<1x8xf32>
      %93 = vector.shape_cast %89 : vector<1x8xf32> to vector<1x1x8xf32>
      tpu.vector_store %arg4[%90, %c0_22, %c0_23], %93 {strides = array<i32>} : memref<128x1x8xf32, #tpu.memory_space<vmem>>, vector<1x1x8xf32>,
    }
    %c128_i32_1 = arith.constant 128 : i32
    return
  }
  func.func @transform_0(%arg0: i32, %arg1: memref<2048xi32, #tpu.memory_space<smem>>) -> (i32, i32, i32) {
    %c0_i32 = arith.constant 0 : i32
    %c0_i32_0 = arith.constant 0 : i32
    %c0_i32_1 = arith.constant 0 : i32
    return %arg0, %c0_i32, %c0_i32_0 : i32, i32, i32
  }
  func.func @transform_1(%arg0: i32, %arg1: memref<2048xi32, #tpu.memory_space<smem>>) -> (i32, i32, i32) {
    %c0_i32 = arith.constant 0 : i32
    %c0_i32_0 = arith.constant 0 : i32
    %c0_i32_1 = arith.constant 0 : i32
    %c0_i32_2 = arith.constant 0 : i32
    return %c0_i32, %c0_i32_0, %c0_i32_1 : i32, i32, i32
  }
  func.func @transform_2(%arg0: i32, %arg1: memref<2048xi32, #tpu.memory_space<smem>>) -> (i32, i32, i32) {
    %c0_i32 = arith.constant 0 : i32
    %c0_i32_0 = arith.constant 0 : i32
    %c0_i32_1 = arith.constant 0 : i32
    return %arg0, %c0_i32, %c0_i32_0 : i32, i32, i32
  }
}

</mosaic_0001>

<llo_original>
// kernel: cubemap_encoding_forward.1
$region0: #{cubemap_encoding_forward.1}
  #allocation0 [shape = 'u32[]', space=smem, size = 0x4, offset = 0x4, fixed_abs, tag = 'smem constant byte address 0x4 - core index']
  #allocation1 [shape = 'u32[72,128]{1,0:T(1,128)}', space=vmem, size = 0x9000, scoped, tag = 'internal scratch']
  #allocation2 [shape = 's32[1]{0}', space=sflag, size = 0x4, scoped, tag = 'scoped memory for cubemap_encoding_forward.1']
  #allocation3 [shape = 'u8[8192]{0}', space=smem, size = 0x2000, scoped, tag = 'prefetched SMEM operand 0']
  %s0 = inlined_call_operand.vmem [shape: s32[2048], index: 0, kind: input, shape index: {}]
  %s1 = inlined_call_operand.vmem [shape: f32[256,8,8], index: 1, kind: input, shape index: {}]
  %s2 = inlined_call_operand.vmem [shape: f32[252,8,8], index: 2, kind: input, shape index: {}]
  %s3 = inlined_call_operand.vmem [shape: f32[256,1,8], index: 3, kind: output, shape index: {}]
  %s4 = sld [smem:[#allocation0]]
  $region48: #{cubemap_encoding_forward.1} parent=0
    _
  %s6 = ssub.s32 1, %s4
  %s7 = scalar_select 0, %s6, %s4
  %s9 = sshll.u32 %s0, 4
  %s10 = int_to_ptr.vmem [resolvable:$true] %s9
  %12 = dma.vmem_to_smem %s10, 256, [#allocation3], [#allocation2]
  %14 = dma.done [#allocation2], 256
  %15 = sfence
  loop: start=0, step=1, limit=4
  $region2: #{cubemap_encoding_forward.1} parent=0 // loop_pre_header
    _
  $region3: #{cubemap_encoding_forward.1} parent=0 // loop_header
    %s17 = sphi 0, %s21
    %p18 = scmp.ge.s32.totalorder %s17, 4
    %s27 = sphi 0, %s29
    %s30 = sphi 0, %s27
    %s31 = sphi 0, %s30
    %s47 = sphi 0, %s31
    %s51 = sphi 0, %s51
    %s53 = sphi 0, %s51
    %s54 = sphi 0, %s53
    %s68 = sphi 0, %s54
    %s74 = sphi 0, %s76
    %s77 = sphi 0, %s74
    %s78 = sphi 0, %s77
    %s94 = sphi 0, %s78
  $region4: #{cubemap_encoding_forward.1} parent=0 // loop_header_branch
    %20 = sbr.rel (%p18) target = $region8
  $region5: #{cubemap_encoding_forward.1} parent=0 // loop_body
    %s22 = ssub.s32 %s17, 1
    %s23 = ssub.s32 %s17, 2
    %s24 = sadd.s32 %s17, 1
    %s25 = ssub.s32 %s17, %s24
    %p26 = scmp.eq.s32.totalorder %s25, 0
    %s28 = sadd.s32 %s27, 1
    %s29 = scalar_select %p26, %s27, %s28
    %p32 = pneg %p26
    %p33 = scmp.eq.s32.totalorder %s17, 1
    %p34 = por %p32, %p33
    %p35 = scmp.ne.s32.totalorder %s27, %s30
    %p36 = scmp.eq.s32.totalorder %s17, 0
    %p37 = por %p35, %p36
    %p38 = scmp.ne.s32.totalorder %s27, %s30
    %p39 = scmp.eq.s32.totalorder %s22, 1
    %p40 = por %p38, %p39
    %p41 = scmp.ne.s32.totalorder %s30, %s31
    %p42 = scmp.eq.s32.totalorder %s22, 0
    %p43 = por %p41, %p42
    %p44 = scmp.ne.s32.totalorder %s30, %s31
    %p45 = scmp.eq.s32.totalorder %s23, 1
    %p46 = por %p44, %p45
    %p48 = scmp.ne.s32.totalorder %s31, %s47
    %p49 = scmp.eq.s32.totalorder %s23, 0
    %p50 = por %p48, %p49
    %s52 = sadd.s32 %s51, 1
    %p55 = scmp.eq.s32.totalorder %s17, 1
    %p56 = scmp.ne.s32.totalorder %s51, %s53
    %p57 = scmp.eq.s32.totalorder %s17, 0
    %p58 = por %p56, %p57
    %p59 = scmp.ne.s32.totalorder %s51, %s53
    %p60 = scmp.eq.s32.totalorder %s22, 1
    %p61 = por %p59, %p60
    %p62 = scmp.ne.s32.totalorder %s53, %s54
    %p63 = scmp.eq.s32.totalorder %s22, 0
    %p64 = por %p62, %p63
    %p65 = scmp.ne.s32.totalorder %s53, %s54
    %p66 = scmp.eq.s32.totalorder %s23, 1
    %p67 = por %p65, %p66
    %p69 = scmp.ne.s32.totalorder %s54, %s68
    %p70 = scmp.eq.s32.totalorder %s23, 0
    %p71 = por %p69, %p70
    %s72 = ssub.s32 %s17, %s24
    %p73 = scmp.eq.s32.totalorder %s72, 0
    %s75 = sadd.s32 %s74, 1
    %s76 = scalar_select %p73, %s74, %s75
    %p79 = pneg %p73
    %p80 = scmp.eq.s32.totalorder %s17, 1
    %p81 = por %p79, %p80
    %p82 = scmp.ne.s32.totalorder %s74, %s77
    %p83 = scmp.eq.s32.totalorder %s17, 0
    %p84 = por %p82, %p83
    %p85 = scmp.ne.s32.totalorder %s74, %s77
    %p86 = scmp.eq.s32.totalorder %s22, 1
    %p87 = por %p85, %p86
    %p88 = scmp.ne.s32.totalorder %s77, %s78
    %p89 = scmp.eq.s32.totalorder %s22, 0
    %p90 = por %p88, %p89
    %p91 = scmp.ne.s32.totalorder %s77, %s78
    %p92 = scmp.eq.s32.totalorder %s23, 1
    %p93 = por %p91, %p92
    %p95 = scmp.ne.s32.totalorder %s78, %s94
    %p96 = scmp.eq.s32.totalorder %s23, 0
    %p97 = por %p95, %p96
    %p98 = scmp.le.s32.totalorder 1, %s17
    %p99 = scmp.lt.s32.totalorder %s17, 3
    %p100 = pnand %p98, %p99
    %p101 = pneg %p100
    // Predicated region
    $region9: #{cubemap_encoding_forward.1} parent=5 // pred_check
      _
    $region10: #{cubemap_encoding_forward.1} parent=5 // pred_check_branch
      %103 = sbr.rel (%p100) target = $region12
    $region11: #{cubemap_encoding_forward.1} parent=5 // pred_region
      %s104 = ssub.s32 %s17, 1
      // Predicated region
      $region13: #{cubemap_encoding_forward.1} parent=11 // pred_check
        %p105 = pneg %p64
      $region14: #{cubemap_encoding_forward.1} parent=11 // pred_check_branch
        %107 = sbr.rel (%p105) target = $region16
      $region15: #{cubemap_encoding_forward.1} parent=11 // pred_region
        _
      $region16: #{cubemap_encoding_forward.1} parent=11 // pred_fallthru
        _
    $region12: #{cubemap_encoding_forward.1} parent=5 // pred_fallthru
      _
    %p108 = scmp.lt.s32.totalorder %s17, 2
    // Predicated region
    $region17: #{cubemap_encoding_forward.1} parent=5 // pred_check
      %p109 = pneg %p108
    $region18: #{cubemap_encoding_forward.1} parent=5 // pred_check_branch
      %111 = sbr.rel (%p109) target = $region20
    $region19: #{cubemap_encoding_forward.1} parent=5 // pred_region
      // Predicated region
      $region21: #{cubemap_encoding_forward.1} parent=19 // pred_check
        %p112 = pneg %p37
      $region22: #{cubemap_encoding_forward.1} parent=19 // pred_check_branch
        %114 = sbr.rel (%p112) target = $region24
      $region23: #{cubemap_encoding_forward.1} parent=19 // pred_region
        %s115 = smul.u32 128, %s17
        %p116 = scmp.lt.s32.totalorder %s115, 255
        %s117 = scalar_select %p116, %s115, 255
        %s118 = smul.addr %s117, 8
        %s119 = scalar_lea.vmem %s1, %s118
        %s120 = smul.u32 128, %s17
      $region24: #{cubemap_encoding_forward.1} parent=19 // pred_fallthru
        _
    $region20: #{cubemap_encoding_forward.1} parent=5 // pred_fallthru
      _
    %p121 = scmp.le.s32.totalorder 1, %s17
    %p122 = scmp.lt.s32.totalorder %s17, 3
    %p123 = pnand %p121, %p122
    %p124 = pneg %p123
    // Predicated region
    $region25: #{cubemap_encoding_forward.1} parent=5 // pred_check
      _
    $region26: #{cubemap_encoding_forward.1} parent=5 // pred_check_branch
      %126 = sbr.rel (%p123) target = $region28
    $region27: #{cubemap_encoding_forward.1} parent=5 // pred_region
      %s127 = ssub.s32 %s17, 1
      %s128 = smul.u32 128, %s22
      %p129 = scmp.lt.s32.totalorder %s128, 255
      %s130 = scalar_select %p129, %s128, 255
      %s131 = smul.addr %s130, 8
      %s132 = scalar_lea.vmem %s1, %s131
      %p133 = pneg %p43
      %p134 = pneg %p40
      %p135 = pneg %p64
      %p136 = pneg %p61
      %p137 = pneg %p90
      %p138 = pneg %p87
      %s139 = smul.u32 128, %s22
      %p140 = scmp.lt.s32.totalorder %s139, 255
      %s141 = scalar_select %p140, %s139, 255
      %s142 = scalar_lea.vmem %s3, %s141
      %s143 = smul.u32 128, %s22
      %p144 = scmp.lt.s32.totalorder %s143, 255
      %s145 = scalar_select %p144, %s143, 255
      %s146 = smul.addr %s145, 8
      %s147 = scalar_lea.vmem %s1, %s146
      %s148 = smul.u32 128, %s22
      %s149 = smul.u32 128, %s22
      %p150 = scmp.lt.s32.totalorder %s149, 255
      %s151 = scalar_select %p150, %s149, 255
      %s152 = scalar_lea.vmem %s3, %s151
      %s153 = smul.u32 128, %s22
      %s154 = smul.u32 %s22, 128
      loop: start=0, step=1, limit=128
      $region29: #{cubemap_encoding_forward.1} parent=27 // loop_pre_header
        _
      $region30: #{cubemap_encoding_forward.1} parent=27 // loop_header
        %s156 = sphi 0, %s160
        %p157 = scmp.ge.s32.totalorder %s156, 128
      $region31: #{cubemap_encoding_forward.1} parent=27 // loop_header_branch
        %159 = sbr.rel (%p157) target = $region35
      $region32: #{cubemap_encoding_forward.1} parent=27 // loop_body
        %s161 = smul.u32 %s156, 8
        %s162 = scalar_lea.vmem %s147, %s161
        %v163 = vld [vmem:[%s162] sm:$0xff]
        %s164 = sadd.s32 %s154, %s156
        %s165 = smul.u32 %s164, 8
        %s166 = sld [smem:[#allocation3 + %s165]]
        %s167 = smul.u32 %s166, 8
        %s168 = scalar_lea.vmem %s2, %s167
        %v169 = vld [vmem:[%s168] sm:$0xff]
        %171 = vset.pattern.permute.xlu0 0
        %172 = vperm.xlu0 %171, %v163
        %v173 = vpop.permute.xlu0 %172
        %v175 = vmul.f32 %v173, %v169
        %v176 = vadd.f32 %v175, 0.0
        %s177 = sadd.s32 %s165, 1
        %s178 = sld [smem:[#allocation3 + %s177]]
        %s179 = smul.u32 %s178, 8
        %s180 = scalar_lea.vmem %s2, %s179
        %v181 = vld [vmem:[%s180] sm:$0xff]
        %182 = vset.pattern.permute.xlu0 1
        %183 = vperm.xlu0 %182, %v163
        %v184 = vpop.permute.xlu0 %183
        %v186 = vmul.f32 %v184, %v181
        %v187 = vadd.f32 %v176, %v186
        %s188 = sadd.s32 %s165, 2
        %s189 = sld [smem:[#allocation3 + %s188]]
        %s190 = smul.u32 %s189, 8
        %s191 = scalar_lea.vmem %s2, %s190
        %v192 = vld [vmem:[%s191] sm:$0xff]
        %193 = vset.pattern.permute.xlu0 2
        %194 = vperm.xlu0 %193, %v163
        %v195 = vpop.permute.xlu0 %194
        %v197 = vmul.f32 %v195, %v192
        %v198 = vadd.f32 %v187, %v197
        %s199 = sadd.s32 %s165, 3
        %s200 = sld [smem:[#allocation3 + %s199]]
        %s201 = smul.u32 %s200, 8
        %s202 = scalar_lea.vmem %s2, %s201
        %v203 = vld [vmem:[%s202] sm:$0xff]
        %204 = vset.pattern.permute.xlu0 3
        %205 = vperm.xlu0 %204, %v163
        %v206 = vpop.permute.xlu0 %205
        %v208 = vmul.f32 %v206, %v203
        %v209 = vadd.f32 %v198, %v208
        %s210 = sadd.s32 %s165, 4
        %s211 = sld [smem:[#allocation3 + %s210]]
        %s212 = smul.u32 %s211, 8
        %s213 = scalar_lea.vmem %s2, %s212
        %v214 = vld [vmem:[%s213] sm:$0xff]
        %215 = vset.pattern.permute.xlu0 4
        %216 = vperm.xlu0 %215, %v163
        %v217 = vpop.permute.xlu0 %216
        %v219 = vmul.f32 %v217, %v214
        %v220 = vadd.f32 %v209, %v219
        %s221 = sadd.s32 %s165, 5
        %s222 = sld [smem:[#allocation3 + %s221]]
        %s223 = smul.u32 %s222, 8
        %s224 = scalar_lea.vmem %s2, %s223
        %v225 = vld [vmem:[%s224] sm:$0xff]
        %226 = vset.pattern.permute.xlu0 5
        %227 = vperm.xlu0 %226, %v163
        %v228 = vpop.permute.xlu0 %227
        %v230 = vmul.f32 %v228, %v225
        %v231 = vadd.f32 %v220, %v230
        %s232 = sadd.s32 %s165, 6
        %s233 = sld [smem:[#allocation3 + %s232]]
        %s234 = smul.u32 %s233, 8
        %s235 = scalar_lea.vmem %s2, %s234
        %v236 = vld [vmem:[%s235] sm:$0xff]
        %237 = vset.pattern.permute.xlu0 6
        %238 = vperm.xlu0 %237, %v163
        %v239 = vpop.permute.xlu0 %238
        %v241 = vmul.f32 %v239, %v236
        %v242 = vadd.f32 %v231, %v241
        %s243 = sadd.s32 %s165, 7
        %s244 = sld [smem:[#allocation3 + %s243]]
        %s245 = smul.u32 %s244, 8
        %s246 = scalar_lea.vmem %s2, %s245
        %v247 = vld [vmem:[%s246] sm:$0xff]
        %248 = vset.pattern.permute.xlu0 7
        %249 = vperm.xlu0 %248, %v163
        %v250 = vpop.permute.xlu0 %249
        %v252 = vmul.f32 %v250, %v247
        %v253 = vadd.f32 %v242, %v252
        %vm254 = vcmask 64512
        %v255 = vsel %vm254, %v253, 0.0
        %v256 = vrot.slane %v255, 4
        %v257 = vadd.f32 %v255, %v256
        %v258 = vrot.slane %v257, 2
        %v259 = vadd.f32 %v257, %v258
        %v260 = vrot.slane %v259, 1
        %v261 = vadd.f32 %v259, %v260
        %s262 = scalar_lea.vmem %s152, %s156
        %vm263 = vcmask 57344
        %264 = vst.msk [vmem:[%s262] sm:$0x1] %vm263, %v261
      $region33: #{cubemap_encoding_forward.1} parent=27 // loop_footer
        %s160 = sadd.s32 1, %s156
      $region34: #{cubemap_encoding_forward.1} parent=27 // loop_footer_branch
        %155 = sbr.rel target = $region30
      $region35: #{cubemap_encoding_forward.1} parent=27 // loop_exit
        _
      %s265 = smul.u32 128, %s22
      %p266 = scmp.lt.s32.totalorder %s265, 255
      %s267 = scalar_select %p266, %s265, 255
      %s268 = scalar_lea.vmem %s3, %s267
      // Predicated region
      $region36: #{cubemap_encoding_forward.1} parent=27 // pred_check
        %p269 = pneg %p87
      $region37: #{cubemap_encoding_forward.1} parent=27 // pred_check_branch
        %271 = sbr.rel (%p269) target = $region39
      $region38: #{cubemap_encoding_forward.1} parent=27 // pred_region
        %s272 = smul.u32 128, %s22
      $region39: #{cubemap_encoding_forward.1} parent=27 // pred_fallthru
        _
    $region28: #{cubemap_encoding_forward.1} parent=5 // pred_fallthru
      _
    %p273 = scmp.le.s32.totalorder 2, %s17
    // Predicated region
    $region40: #{cubemap_encoding_forward.1} parent=5 // pred_check
      %p274 = pneg %p273
    $region41: #{cubemap_encoding_forward.1} parent=5 // pred_check_branch
      %276 = sbr.rel (%p274) target = $region43
    $region42: #{cubemap_encoding_forward.1} parent=5 // pred_region
      %s277 = ssub.s32 %s17, 2
      // Predicated region
      $region44: #{cubemap_encoding_forward.1} parent=42 // pred_check
        %p278 = pneg %p93
      $region45: #{cubemap_encoding_forward.1} parent=42 // pred_check_branch
        %280 = sbr.rel (%p278) target = $region47
      $region46: #{cubemap_encoding_forward.1} parent=42 // pred_region
        %s281 = smul.u32 128, %s23
        %p282 = scmp.lt.s32.totalorder %s281, 255
        %s283 = scalar_select %p282, %s281, 255
        %s284 = scalar_lea.vmem %s3, %s283
      $region47: #{cubemap_encoding_forward.1} parent=42 // pred_fallthru
        _
    $region43: #{cubemap_encoding_forward.1} parent=5 // pred_fallthru
      _
  $region6: #{cubemap_encoding_forward.1} parent=0 // loop_footer
    %s21 = sadd.s32 1, %s17
  $region7: #{cubemap_encoding_forward.1} parent=0 // loop_footer_branch
    %16 = sbr.rel target = $region3
  $region8: #{cubemap_encoding_forward.1} parent=0 // loop_exit
    _

</llo_original>
